<compile_context>
chip_gen: v6e
topology: v6e:2x2x1
jax: 0.10.0
libtpu: 0.0.40
codegen_flags: <defaults>
</compile_context>

<pallas_src>
import jax
import jax.numpy as jnp
import numpy as np
from jax.experimental import pallas as pl
from jax.experimental.pallas import tpu as pltpu

NUM_FEATURES = 1000
NUM_CLASSES = 10
BN_EPS = 1e-5


def head_kernel(x_ref, w_ref, b_ref, o_ref):
    """Fused (BN-folded) classifier head: logits = x @ W_eff + b_eff.

    x_ref : [Bt, 1000] f32   backbone features (tile or full array)
    w_ref : [1000, 10] bf16  BN-folded weights
    b_ref : [1, 10]    f32   BN-folded bias
    o_ref : [Bt, 10]   f32   logits
    """
    x = x_ref[...].astype(jnp.bfloat16)  # in-register cast -> native bf16 MXU path
    o_ref[...] = (
        jnp.dot(x, w_ref[...], preferred_element_type=jnp.float32) + b_ref[...]
    )


def fold_bn_into_linear(bn_mean, bn_var, bn_gamma, bn_beta, w, b):
    """One-time constant fold of eval-mode BatchNorm1d into the Linear layer.

    Returns (W_eff [1000, 10] bf16, b_eff [1, 10] f32). No padding: only the real
    columns are stored / DMA'd; Mosaic handles the ragged lane tile in-vreg.
    """
    scale = bn_gamma * jax.lax.rsqrt(bn_var + BN_EPS)            # [F]
    shift = bn_beta - bn_mean * scale                            # [F]
    wt = w.T.astype(jnp.float32)                                 # [F, C]
    w_eff = (wt * scale[:, None]).astype(jnp.bfloat16)           # [F, C] bf16
    b_eff = (b.astype(jnp.float32) + shift @ wt).reshape(1, -1)  # [1, C] f32
    return w_eff, b_eff


def build_model_head(feats, w_eff, b_eff, *, m_tile=256):
    """feats: [B, 1000] f32 backbone features -> logits [B, 10] f32.

    w_eff / b_eff come from `fold_bn_into_linear` (computed once, reused per call).
    Dropout(0.5) is the identity at inference time.
    m_tile: batch tile for the gridded path (256 for v6e/v7x, 128 suggested for v5e).
    """
    B, F = feats.shape
    C = b_eff.shape[-1]
    cost = pl.CostEstimate(
        flops=2 * B * F * C,
        transcendentals=0,
        bytes_accessed=(
            feats.size * feats.dtype.itemsize
            + w_eff.size * w_eff.dtype.itemsize
            + b_eff.size * b_eff.dtype.itemsize
            + B * C * 4
        ),
    )
    vmem = pl.BlockSpec(memory_space=pltpu.MemorySpace.VMEM)

    if B <= m_tile:
        # Tiny batch: single invocation, everything VMEM-resident, zero wrapper copies.
        return pl.pallas_call(
            head_kernel,
            out_shape=jax.ShapeDtypeStruct((B, C), jnp.float32),
            in_specs=[vmem, vmem, vmem],
            out_specs=vmem,
            cost_estimate=cost,
        )(feats, w_eff, b_eff)

    # Large batch: grid over the batch dimension; "parallel" lets megacore parts
    # (v7x: 2 TCs) shard rows. Weight/bias block indices are grid-invariant, so they
    # are DMA'd once and reused across steps.
    Bp = pl.cdiv(B, m_tile) * m_tile
    if Bp != B:
        feats = jnp.pad(feats, ((0, Bp - B), (0, 0)))
    out = pl.pallas_call(
        head_kernel,
        out_shape=jax.ShapeDtypeStruct((Bp, C), jnp.float32),
        grid=(Bp // m_tile,),
        in_specs=[
            pl.BlockSpec((m_tile, F), lambda i: (i, 0)),
            pl.BlockSpec((F, C), lambda i: (0, 0)),
            pl.BlockSpec((1, C), lambda i: (0, 0)),
        ],
        out_specs=pl.BlockSpec((m_tile, C), lambda i: (i, 0)),
        compiler_params=pltpu.CompilerParams(dimension_semantics=("parallel",)),
        cost_estimate=cost,
    )(feats, w_eff, b_eff)
    return out[:B]


def reference_head(feats, bn_mean, bn_var, bn_gamma, bn_beta, w, b):
    x_hat = (feats - bn_mean) / jnp.sqrt(bn_var + BN_EPS) * bn_gamma + bn_beta
    return x_hat @ w.T + b


if __name__ == "__main__":
    key = jax.random.PRNGKey(0)
    k_feat, k_mean, k_var, k_gamma, k_beta, k_w, k_b = jax.random.split(key, 7)

    B = 2
    # Backbone output features (stand-in for efficientnet_v2_s(input) -> [B, 1000]).
    feats = jax.random.normal(k_feat, (B, NUM_FEATURES), dtype=jnp.float32)

    # BatchNorm1d(1000) parameters / running stats (deterministic, nontrivial values).
    bn_mean = 0.1 * jax.random.normal(k_mean, (NUM_FEATURES,), dtype=jnp.float32)
    bn_var = jnp.abs(jax.random.normal(k_var, (NUM_FEATURES,), dtype=jnp.float32)) + 0.5
    bn_gamma = 1.0 + 0.1 * jax.random.normal(k_gamma, (NUM_FEATURES,), dtype=jnp.float32)
    bn_beta = 0.1 * jax.random.normal(k_beta, (NUM_FEATURES,), dtype=jnp.float32)

    # Linear(1000, 10): PyTorch default init U(-1/sqrt(fan_in), 1/sqrt(fan_in)).
    bound = 1.0 / np.sqrt(NUM_FEATURES)
    w = jax.random.uniform(k_w, (NUM_CLASSES, NUM_FEATURES),
                           minval=-bound, maxval=bound, dtype=jnp.float32)
    b = jax.random.uniform(k_b, (NUM_CLASSES,),
                           minval=-bound, maxval=bound, dtype=jnp.float32)

    # One-time constant fold of BN into the Linear weights (outside the hot path).
    w_eff, b_eff = fold_bn_into_linear(bn_mean, bn_var, bn_gamma, bn_beta, w, b)
    w_eff = jax.block_until_ready(w_eff)
    b_eff = jax.block_until_ready(b_eff)

    out = build_model_head(feats, w_eff, b_eff)
    out = jax.block_until_ready(out)

    ref = reference_head(feats, bn_mean, bn_var, bn_gamma, bn_beta, w, b)
    # bf16 weights / activations on the MXU (f32 accumulate): tolerance loosened vs f32.
    np.testing.assert_allclose(np.asarray(out), np.asarray(ref), rtol=2e-2, atol=2e-2)
    assert out.shape == (B, NUM_CLASSES)

    print("KERNEL_OK")
</pallas_src>

<mosaic_0001>
module attributes {stable_mosaic.version = 11 : i64} {
  func.func @head_kernel(%arg0: memref<2x1000xf32, #tpu.memory_space<vmem>>, %arg1: memref<1000x10xbf16, #tpu.memory_space<vmem>>, %arg2: memref<1x10xf32, #tpu.memory_space<vmem>>, %arg3: memref<2x10xf32, #tpu.memory_space<vmem>>) attributes {dimension_semantics = [], scalar_prefetch = 0 : i64, scratch_operands = 0 : i64, tpu.core_type = #tpu.core_type<tc>} {
    %c0 = arith.constant 0 : index
    %c0_0 = arith.constant 0 : index
    %0 = vector.load %arg0[%c0, %c0_0] : memref<2x1000xf32, #tpu.memory_space<vmem>>, vector<2x1000xf32>
    %1 = arith.truncf %0 : vector<2x1000xf32> to vector<2x1000xbf16>
    %c0_1 = arith.constant 0 : index
    %c0_2 = arith.constant 0 : index
    %2 = vector.load %arg1[%c0_1, %c0_2] : memref<1000x10xbf16, #tpu.memory_space<vmem>>, vector<1000x10xbf16>
    %cst = arith.constant dense<0.000000e+00> : vector<2x10xf32>
    %3 = tpu.matmul %1, %2, %cst {dimension_numbers = #tpu.dot_dimension_numbers<[1], [0], [0], [1], [0, 0, 1, 1], [], []>} : vector<2x1000xbf16>, vector<1000x10xbf16>, vector<2x10xf32> -> vector<2x10xf32>
    %c0_3 = arith.constant 0 : index
    %c0_4 = arith.constant 0 : index
    %4 = vector.load %arg2[%c0_3, %c0_4] : memref<1x10xf32, #tpu.memory_space<vmem>>, vector<1x10xf32>
    %5 = vector.broadcast %4 : vector<1x10xf32> to vector<2x10xf32>
    %6 = arith.addf %3, %5 : vector<2x10xf32>
    %c0_5 = arith.constant 0 : index
    %c0_6 = arith.constant 0 : index
    %7 = vector.load %arg3[%c0_5, %c0_6] : memref<2x10xf32, #tpu.memory_space<vmem>>, vector<2x10xf32>
    tpu.vector_store %arg3[%c0_5, %c0_6], %6 {strides = array<i32>} : memref<2x10xf32, #tpu.memory_space<vmem>>, vector<2x10xf32>,
    return
  }
}

</mosaic_0001>

<llo_original>
// kernel: tpu_custom_call.1
$region0: #{tpu_custom_call.1}
  #allocation0 [shape = 'u32[]', space=smem, size = 0x4, offset = 0x4, fixed_abs, tag = 'smem constant byte address 0x4 - core index']
  #allocation1 [shape = 'u32[144,128]{1,0:T(1,128)}', space=vmem, size = 0x12000, scoped, tag = 'internal scratch']
  %s0 = inlined_call_operand.vmem [shape: f32[2,1000], index: 0, kind: input, shape index: {}]
  %s1 = inlined_call_operand.vmem [shape: bf16[1000,10], index: 1, kind: input, shape index: {}]
  %s2 = inlined_call_operand.vmem [shape: f32[1,10], index: 2, kind: input, shape index: {}]
  %s3 = inlined_call_operand.hbm [shape: f32[2,10], index: 3, kind: output, shape index: {}]
  %s4 = sld [smem:[#allocation0]]
  $region22: #{tpu_custom_call.1} parent=0
    _
  %s6 = ssub.s32 1, %s4
  %s7 = scalar_select 0, %s6, %s4
  $region1: #{tpu_custom_call.1} parent=0
    #allocation2 [shape = 'u8[1024]{0}', space=vmem, size = 0x400, scoped, tag = 'output window, operand 0, single buffered']
    #allocation3 [shape = 's32[1]{0}', space=sflag, size = 0x4, scoped, tag = 'scoped memory for tpu_custom_call.1']
    %8 = vsyncpa [#allocation3], 0
    // Predicated region
    $region2: #{tpu_custom_call.1} parent=1 // pred_check
      _
    $region3: #{tpu_custom_call.1} parent=1 // pred_check_branch
      %10 = sbr.rel (0) target = $region5
    $region4: #{tpu_custom_call.1} parent=1 // pred_region
      _
    $region5: #{tpu_custom_call.1} parent=1 // pred_fallthru
      _
    // Predicated region
    $region6: #{tpu_custom_call.1} parent=1 // pred_check
      _
    $region7: #{tpu_custom_call.1} parent=1 // pred_check_branch
      %12 = sbr.rel (0) target = $region9
    $region8: #{tpu_custom_call.1} parent=1 // pred_region
      _
    $region9: #{tpu_custom_call.1} parent=1 // pred_fallthru
      _
    // Predicated region
    $region10: #{tpu_custom_call.1} parent=1 // pred_check
      _
    $region11: #{tpu_custom_call.1} parent=1 // pred_check_branch
      %14 = sbr.rel (0) target = $region13
    $region12: #{tpu_custom_call.1} parent=1 // pred_region
      _
    $region13: #{tpu_custom_call.1} parent=1 // pred_fallthru
      _
    %v16 = vld [vmem:[%s0] sm:$0xff]
    %v17 = vld [vmem:[%s0 + $0x8] sm:$0xff]
    %v20 = vcombine.high %v16, %v16
    %v22 = vunpack.c.l.s4 1983009808
    %v23 = vunpack.c.0.s8 %v22
    %v24 = vlaneseq
    %v25 = vshrl.u32 %v24, 7
    %v26 = vsub.s32 %v23, %v25
    %v27 = vrot.slane %v16, %v26
    %v29 = vunpack.c.l.s4 1983009808
    %v30 = vunpack.c.0.s8 %v29
    %v31 = vlaneseq
    %v32 = vshrl.u32 %v31, 7
    %v33 = vsub.s32 %v30, %v32
    %v34 = vrot.slane %v20, %v33
    %v35 = vcombine.high %v27, %v27
    %v36 = vcombine.high %v34, %v34
    %v37 = vcombine.high %v17, %v17
    %v39 = vunpack.c.l.s4 1983009808
    %v40 = vunpack.c.0.s8 %v39
    %v41 = vlaneseq
    %v42 = vshrl.u32 %v41, 7
    %v43 = vsub.s32 %v40, %v42
    %v44 = vrot.slane %v17, %v43
    %v46 = vunpack.c.l.s4 1983009808
    %v47 = vunpack.c.0.s8 %v46
    %v48 = vlaneseq
    %v49 = vshrl.u32 %v48, 7
    %v50 = vsub.s32 %v47, %v49
    %v51 = vrot.slane %v37, %v50
    %v52 = vcombine.high %v44, %v44
    %v53 = vcombine.high %v51, %v51
    %v62 = vpack.c.bf16 %v27, %v27
    %v63 = vpack.c.bf16 %v35, %v35
    %v64 = vpack.c.bf16 %v34, %v34
    %v65 = vpack.c.bf16 %v36, %v36
    %v66 = vpack.c.bf16 %v44, %v44
    %v67 = vpack.c.bf16 %v52, %v52
    %v68 = vpack.c.bf16 %v51, %v51
    %v69 = vpack.c.bf16 %v53, %v53
    %v70 = vld [vmem:[%s1] sm:$0xf]
    %v71 = vld [vmem:[%s1 + $0x4] sm:$0xf]
    %v72 = vld [vmem:[%s1 + $0x8] sm:$0xf]
    %v73 = vld [vmem:[%s1 + $0xc] sm:$0xf]
    %v74 = vld [vmem:[%s1 + $0x10] sm:$0xf]
    %v75 = vld [vmem:[%s1 + $0x14] sm:$0xf]
    %v76 = vld [vmem:[%s1 + $0x18] sm:$0xf]
    %v77 = vld [vmem:[%s1 + $0x1c] sm:$0xf]
    %v78 = vld [vmem:[%s1 + $0x20] sm:$0xf]
    %v79 = vld [vmem:[%s1 + $0x24] sm:$0xf]
    %v80 = vld [vmem:[%s1 + $0x28] sm:$0xf]
    %v81 = vld [vmem:[%s1 + $0x2c] sm:$0xf]
    %v82 = vld [vmem:[%s1 + $0x30] sm:$0xf]
    %v83 = vld [vmem:[%s1 + $0x34] sm:$0xf]
    %v84 = vld [vmem:[%s1 + $0x38] sm:$0xf]
    %v85 = vld [vmem:[%s1 + $0x3c] sm:$0xf]
    %v86 = vld [vmem:[%s1 + $0x40] sm:$0xf]
    %v87 = vld [vmem:[%s1 + $0x44] sm:$0xf]
    %v88 = vld [vmem:[%s1 + $0x48] sm:$0xf]
    %v89 = vld [vmem:[%s1 + $0x4c] sm:$0xf]
    %v90 = vld [vmem:[%s1 + $0x50] sm:$0xf]
    %v91 = vld [vmem:[%s1 + $0x54] sm:$0xf]
    %v92 = vld [vmem:[%s1 + $0x58] sm:$0xf]
    %v93 = vld [vmem:[%s1 + $0x5c] sm:$0xf]
    %v94 = vld [vmem:[%s1 + $0x60] sm:$0xf]
    %v95 = vld [vmem:[%s1 + $0x64] sm:$0xf]
    %v96 = vld [vmem:[%s1 + $0x68] sm:$0xf]
    %v97 = vld [vmem:[%s1 + $0x6c] sm:$0xf]
    %v98 = vld [vmem:[%s1 + $0x70] sm:$0xf]
    %v99 = vld [vmem:[%s1 + $0x74] sm:$0xf]
    %v100 = vld [vmem:[%s1 + $0x78] sm:$0xf]
    %v101 = vld [vmem:[%s1 + $0x7c] sm:$0xf]
    %v102 = vld [vmem:[%s1 + $0x80] sm:$0xf]
    %v103 = vld [vmem:[%s1 + $0x84] sm:$0xf]
    %v104 = vld [vmem:[%s1 + $0x88] sm:$0xf]
    %v105 = vld [vmem:[%s1 + $0x8c] sm:$0xf]
    %v106 = vld [vmem:[%s1 + $0x90] sm:$0xf]
    %v107 = vld [vmem:[%s1 + $0x94] sm:$0xf]
    %v108 = vld [vmem:[%s1 + $0x98] sm:$0xf]
    %v109 = vld [vmem:[%s1 + $0x9c] sm:$0xf]
    %v110 = vld [vmem:[%s1 + $0xa0] sm:$0xf]
    %v111 = vld [vmem:[%s1 + $0xa4] sm:$0xf]
    %v112 = vld [vmem:[%s1 + $0xa8] sm:$0xf]
    %v113 = vld [vmem:[%s1 + $0xac] sm:$0xf]
    %v114 = vld [vmem:[%s1 + $0xb0] sm:$0xf]
    %v115 = vld [vmem:[%s1 + $0xb4] sm:$0xf]
    %v116 = vld [vmem:[%s1 + $0xb8] sm:$0xf]
    %v117 = vld [vmem:[%s1 + $0xbc] sm:$0xf]
    %v118 = vld [vmem:[%s1 + $0xc0] sm:$0xf]
    %v119 = vld [vmem:[%s1 + $0xc4] sm:$0xf]
    %v120 = vld [vmem:[%s1 + $0xc8] sm:$0xf]
    %v121 = vld [vmem:[%s1 + $0xcc] sm:$0xf]
    %v122 = vld [vmem:[%s1 + $0xd0] sm:$0xf]
    %v123 = vld [vmem:[%s1 + $0xd4] sm:$0xf]
    %v124 = vld [vmem:[%s1 + $0xd8] sm:$0xf]
    %v125 = vld [vmem:[%s1 + $0xdc] sm:$0xf]
    %v126 = vld [vmem:[%s1 + $0xe0] sm:$0xf]
    %v127 = vld [vmem:[%s1 + $0xe4] sm:$0xf]
    %v128 = vld [vmem:[%s1 + $0xe8] sm:$0xf]
    %v129 = vld [vmem:[%s1 + $0xec] sm:$0xf]
    %v130 = vld [vmem:[%s1 + $0xf0] sm:$0xf]
    %v131 = vld [vmem:[%s1 + $0xf4] sm:$0xf]
    %v132 = vld [vmem:[%s1 + $0xf8] sm:$0xf]
    %v133 = vld [vmem:[%s1 + $0xfc] sm:$0xf]
    %v134 = vld [vmem:[%s1 + $0x100] sm:$0xf]
    %v135 = vld [vmem:[%s1 + $0x104] sm:$0xf]
    %v136 = vld [vmem:[%s1 + $0x108] sm:$0xf]
    %v137 = vld [vmem:[%s1 + $0x10c] sm:$0xf]
    %v138 = vld [vmem:[%s1 + $0x110] sm:$0xf]
    %v139 = vld [vmem:[%s1 + $0x114] sm:$0xf]
    %v140 = vld [vmem:[%s1 + $0x118] sm:$0xf]
    %v141 = vld [vmem:[%s1 + $0x11c] sm:$0xf]
    %v142 = vld [vmem:[%s1 + $0x120] sm:$0xf]
    %v143 = vld [vmem:[%s1 + $0x124] sm:$0xf]
    %v144 = vld [vmem:[%s1 + $0x128] sm:$0xf]
    %v145 = vld [vmem:[%s1 + $0x12c] sm:$0xf]
    %v146 = vld [vmem:[%s1 + $0x130] sm:$0xf]
    %v147 = vld [vmem:[%s1 + $0x134] sm:$0xf]
    %v148 = vld [vmem:[%s1 + $0x138] sm:$0xf]
    %v149 = vld [vmem:[%s1 + $0x13c] sm:$0xf]
    %v150 = vld [vmem:[%s1 + $0x140] sm:$0xf]
    %v151 = vld [vmem:[%s1 + $0x144] sm:$0xf]
    %v152 = vld [vmem:[%s1 + $0x148] sm:$0xf]
    %v153 = vld [vmem:[%s1 + $0x14c] sm:$0xf]
    %v154 = vld [vmem:[%s1 + $0x150] sm:$0xf]
    %v155 = vld [vmem:[%s1 + $0x154] sm:$0xf]
    %v156 = vld [vmem:[%s1 + $0x158] sm:$0xf]
    %v157 = vld [vmem:[%s1 + $0x15c] sm:$0xf]
    %v158 = vld [vmem:[%s1 + $0x160] sm:$0xf]
    %v159 = vld [vmem:[%s1 + $0x164] sm:$0xf]
    %v160 = vld [vmem:[%s1 + $0x168] sm:$0xf]
    %v161 = vld [vmem:[%s1 + $0x16c] sm:$0xf]
    %v162 = vld [vmem:[%s1 + $0x170] sm:$0xf]
    %v163 = vld [vmem:[%s1 + $0x174] sm:$0xf]
    %v164 = vld [vmem:[%s1 + $0x178] sm:$0xf]
    %v165 = vld [vmem:[%s1 + $0x17c] sm:$0xf]
    %v166 = vld [vmem:[%s1 + $0x180] sm:$0xf]
    %v167 = vld [vmem:[%s1 + $0x184] sm:$0xf]
    %v168 = vld [vmem:[%s1 + $0x188] sm:$0xf]
    %v169 = vld [vmem:[%s1 + $0x18c] sm:$0xf]
    %v170 = vld [vmem:[%s1 + $0x190] sm:$0xf]
    %v171 = vld [vmem:[%s1 + $0x194] sm:$0xf]
    %v172 = vld [vmem:[%s1 + $0x198] sm:$0xf]
    %v173 = vld [vmem:[%s1 + $0x19c] sm:$0xf]
    %v174 = vld [vmem:[%s1 + $0x1a0] sm:$0xf]
    %v175 = vld [vmem:[%s1 + $0x1a4] sm:$0xf]
    %v176 = vld [vmem:[%s1 + $0x1a8] sm:$0xf]
    %v177 = vld [vmem:[%s1 + $0x1ac] sm:$0xf]
    %v178 = vld [vmem:[%s1 + $0x1b0] sm:$0xf]
    %v179 = vld [vmem:[%s1 + $0x1b4] sm:$0xf]
    %v180 = vld [vmem:[%s1 + $0x1b8] sm:$0xf]
    %v181 = vld [vmem:[%s1 + $0x1bc] sm:$0xf]
    %v182 = vld [vmem:[%s1 + $0x1c0] sm:$0xf]
    %v183 = vld [vmem:[%s1 + $0x1c4] sm:$0xf]
    %v184 = vld [vmem:[%s1 + $0x1c8] sm:$0xf]
    %v185 = vld [vmem:[%s1 + $0x1cc] sm:$0xf]
    %v186 = vld [vmem:[%s1 + $0x1d0] sm:$0xf]
    %v187 = vld [vmem:[%s1 + $0x1d4] sm:$0xf]
    %v188 = vld [vmem:[%s1 + $0x1d8] sm:$0xf]
    %v189 = vld [vmem:[%s1 + $0x1dc] sm:$0xf]
    %v190 = vld [vmem:[%s1 + $0x1e0] sm:$0xf]
    %v191 = vld [vmem:[%s1 + $0x1e4] sm:$0xf]
    %v192 = vld [vmem:[%s1 + $0x1e8] sm:$0xf]
    %v193 = vld [vmem:[%s1 + $0x1ec] sm:$0xf]
    %v194 = vld [vmem:[%s1 + $0x1f0] sm:$0xf]
    %v195 = vld [vmem:[%s2] sm:$0x1]
    %v197 = vlaneseq
    %v198 = vshrl.u32 %v197, 7
    %v199 = vsub.s32 0, %v198
    %v200 = vrot.slane %v195, %v199
    %v327 = vunpack.c.l.b16 %v70
    %v328 = vunpack.c.l.b16 %v71
    %v329 = vunpack.c.l.b16 %v72
    %v330 = vunpack.c.l.b16 %v73
    %v331 = vunpack.c.l.b16 %v74
    %v332 = vunpack.c.l.b16 %v75
    %v333 = vunpack.c.l.b16 %v76
    %v334 = vunpack.c.l.b16 %v77
    %v335 = vunpack.c.l.b16 %v78
    %v336 = vunpack.c.l.b16 %v79
    %v337 = vunpack.c.l.b16 %v80
    %v338 = vunpack.c.l.b16 %v81
    %v339 = vunpack.c.l.b16 %v82
    %v340 = vunpack.c.l.b16 %v83
    %v341 = vunpack.c.l.b16 %v84
    %v342 = vunpack.c.l.b16 %v85
    %v343 = vunpack.c.l.b16 %v86
    %v344 = vunpack.c.l.b16 %v87
    %v345 = vunpack.c.l.b16 %v88
    %v346 = vunpack.c.l.b16 %v89
    %v347 = vunpack.c.l.b16 %v90
    %v348 = vunpack.c.l.b16 %v91
    %v349 = vunpack.c.l.b16 %v92
    %v350 = vunpack.c.l.b16 %v93
    %v351 = vunpack.c.l.b16 %v94
    %v352 = vunpack.c.l.b16 %v95
    %v353 = vunpack.c.l.b16 %v96
    %v354 = vunpack.c.l.b16 %v97
    %v355 = vunpack.c.l.b16 %v98
    %v356 = vunpack.c.l.b16 %v99
    %v357 = vunpack.c.l.b16 %v100
    %v358 = vunpack.c.l.b16 %v101
    %v359 = vunpack.c.l.b16 %v102
    %v360 = vunpack.c.l.b16 %v103
    %v361 = vunpack.c.l.b16 %v104
    %v362 = vunpack.c.l.b16 %v105
    %v363 = vunpack.c.l.b16 %v106
    %v364 = vunpack.c.l.b16 %v107
    %v365 = vunpack.c.l.b16 %v108
    %v366 = vunpack.c.l.b16 %v109
    %v367 = vunpack.c.l.b16 %v110
    %v368 = vunpack.c.l.b16 %v111
    %v369 = vunpack.c.l.b16 %v112
    %v370 = vunpack.c.l.b16 %v113
    %v371 = vunpack.c.l.b16 %v114
    %v372 = vunpack.c.l.b16 %v115
    %v373 = vunpack.c.l.b16 %v116
    %v374 = vunpack.c.l.b16 %v117
    %v375 = vunpack.c.l.b16 %v118
    %v376 = vunpack.c.l.b16 %v119
    %v377 = vunpack.c.l.b16 %v120
    %v378 = vunpack.c.l.b16 %v121
    %v379 = vunpack.c.l.b16 %v122
    %v380 = vunpack.c.l.b16 %v123
    %v381 = vunpack.c.l.b16 %v124
    %v382 = vunpack.c.l.b16 %v125
    %v383 = vunpack.c.l.b16 %v126
    %v384 = vunpack.c.l.b16 %v127
    %v385 = vunpack.c.l.b16 %v128
    %v386 = vunpack.c.l.b16 %v129
    %v387 = vunpack.c.l.b16 %v130
    %v388 = vunpack.c.l.b16 %v131
    %v389 = vunpack.c.l.b16 %v132
    %v390 = vunpack.c.l.b16 %v133
    %v391 = vunpack.c.l.b16 %v134
    %v392 = vunpack.c.l.b16 %v135
    %v393 = vunpack.c.l.b16 %v136
    %v394 = vunpack.c.l.b16 %v137
    %v395 = vunpack.c.l.b16 %v138
    %v396 = vunpack.c.l.b16 %v139
    %v397 = vunpack.c.l.b16 %v140
    %v398 = vunpack.c.l.b16 %v141
    %v399 = vunpack.c.l.b16 %v142
    %v400 = vunpack.c.l.b16 %v143
    %v401 = vunpack.c.l.b16 %v144
    %v402 = vunpack.c.l.b16 %v145
    %v403 = vunpack.c.l.b16 %v146
    %v404 = vunpack.c.l.b16 %v147
    %v405 = vunpack.c.l.b16 %v148
    %v406 = vunpack.c.l.b16 %v149
    %v407 = vunpack.c.l.b16 %v150
    %v408 = vunpack.c.l.b16 %v151
    %v409 = vunpack.c.l.b16 %v152
    %v410 = vunpack.c.l.b16 %v153
    %v411 = vunpack.c.l.b16 %v154
    %v412 = vunpack.c.l.b16 %v155
    %v413 = vunpack.c.l.b16 %v156
    %v414 = vunpack.c.l.b16 %v157
    %v415 = vunpack.c.l.b16 %v158
    %v416 = vunpack.c.l.b16 %v159
    %v417 = vunpack.c.l.b16 %v160
    %v418 = vunpack.c.l.b16 %v161
    %v419 = vunpack.c.l.b16 %v162
    %v420 = vunpack.c.l.b16 %v163
    %v421 = vunpack.c.l.b16 %v164
    %v422 = vunpack.c.l.b16 %v165
    %v423 = vunpack.c.l.b16 %v166
    %v424 = vunpack.c.l.b16 %v167
    %v425 = vunpack.c.l.b16 %v168
    %v426 = vunpack.c.l.b16 %v169
    %v427 = vunpack.c.l.b16 %v170
    %v428 = vunpack.c.l.b16 %v171
    %v429 = vunpack.c.l.b16 %v172
    %v430 = vunpack.c.l.b16 %v173
    %v431 = vunpack.c.l.b16 %v174
    %v432 = vunpack.c.l.b16 %v175
    %v433 = vunpack.c.l.b16 %v176
    %v434 = vunpack.c.l.b16 %v177
    %v435 = vunpack.c.l.b16 %v178
    %v436 = vunpack.c.l.b16 %v179
    %v437 = vunpack.c.l.b16 %v180
    %v438 = vunpack.c.l.b16 %v181
    %v439 = vunpack.c.l.b16 %v182
    %v440 = vunpack.c.l.b16 %v183
    %v441 = vunpack.c.l.b16 %v184
    %v442 = vunpack.c.l.b16 %v185
    %v443 = vunpack.c.l.b16 %v186
    %v444 = vunpack.c.l.b16 %v187
    %v445 = vunpack.c.l.b16 %v188
    %v446 = vunpack.c.l.b16 %v189
    %v447 = vunpack.c.l.b16 %v190
    %v448 = vunpack.c.l.b16 %v191
    %v449 = vunpack.c.l.b16 %v192
    %v450 = vunpack.c.l.b16 %v193
    %v451 = vunpack.c.l.b16 %v194
    %v452 = vpack.c.b16 %v328, %v327
    %v453 = vpack.c.b16 %v330, %v329
    %v454 = vpack.c.b16 %v332, %v331
    %v455 = vpack.c.b16 %v334, %v333
    %v456 = vpack.c.b16 %v336, %v335
    %v457 = vpack.c.b16 %v338, %v337
    %v458 = vpack.c.b16 %v340, %v339
    %v459 = vpack.c.b16 %v342, %v341
    %v460 = vpack.c.b16 %v344, %v343
    %v461 = vpack.c.b16 %v346, %v345
    %v462 = vpack.c.b16 %v348, %v347
    %v463 = vpack.c.b16 %v350, %v349
    %v464 = vpack.c.b16 %v352, %v351
    %v465 = vpack.c.b16 %v354, %v353
    %v466 = vpack.c.b16 %v356, %v355
    %v467 = vpack.c.b16 %v358, %v357
    %v468 = vpack.c.b16 %v360, %v359
    %v469 = vpack.c.b16 %v362, %v361
    %v470 = vpack.c.b16 %v364, %v363
    %v471 = vpack.c.b16 %v366, %v365
    %v472 = vpack.c.b16 %v368, %v367
    %v473 = vpack.c.b16 %v370, %v369
    %v474 = vpack.c.b16 %v372, %v371
    %v475 = vpack.c.b16 %v374, %v373
    %v476 = vpack.c.b16 %v376, %v375
    %v477 = vpack.c.b16 %v378, %v377
    %v478 = vpack.c.b16 %v380, %v379
    %v479 = vpack.c.b16 %v382, %v381
    %v480 = vpack.c.b16 %v384, %v383
    %v481 = vpack.c.b16 %v386, %v385
    %v482 = vpack.c.b16 %v388, %v387
    %v483 = vpack.c.b16 %v390, %v389
    %v484 = vpack.c.b16 %v392, %v391
    %v485 = vpack.c.b16 %v394, %v393
    %v486 = vpack.c.b16 %v396, %v395
    %v487 = vpack.c.b16 %v398, %v397
    %v488 = vpack.c.b16 %v400, %v399
    %v489 = vpack.c.b16 %v402, %v401
    %v490 = vpack.c.b16 %v404, %v403
    %v491 = vpack.c.b16 %v406, %v405
    %v492 = vpack.c.b16 %v408, %v407
    %v493 = vpack.c.b16 %v410, %v409
    %v494 = vpack.c.b16 %v412, %v411
    %v495 = vpack.c.b16 %v414, %v413
    %v496 = vpack.c.b16 %v416, %v415
    %v497 = vpack.c.b16 %v418, %v417
    %v498 = vpack.c.b16 %v420, %v419
    %v499 = vpack.c.b16 %v422, %v421
    %v500 = vpack.c.b16 %v424, %v423
    %v501 = vpack.c.b16 %v426, %v425
    %v502 = vpack.c.b16 %v428, %v427
    %v503 = vpack.c.b16 %v430, %v429
    %v504 = vpack.c.b16 %v432, %v431
    %v505 = vpack.c.b16 %v434, %v433
    %v506 = vpack.c.b16 %v436, %v435
    %v507 = vpack.c.b16 %v438, %v437
    %v508 = vpack.c.b16 %v440, %v439
    %v509 = vpack.c.b16 %v442, %v441
    %v510 = vpack.c.b16 %v444, %v443
    %v511 = vpack.c.b16 %v446, %v445
    %v512 = vpack.c.b16 %v448, %v447
    %v513 = vpack.c.b16 %v450, %v449
    %v514 = vpack.c.b16 %v451, %v451
    %vm577 = vcmask 850944
    %v579 = vsel %vm577, %v69, 0
    %vm581 = vcmask 1043456
    %v583 = vsel %vm581, %v514, 0
    %585 = vmatprep.subr.bf16.mxu0 0
    %586 = vmatpush1.bf16.msra.mxu0 %v459
    %587 = vmatprep.subr.bf16.mxu0 0
    %588 = vmatpush1.bf16.msra.mxu0 %v458
    %589 = vmatprep.subr.bf16.mxu0 0
    %590 = vmatpush1.bf16.msra.mxu0 %v457
    %591 = vmatprep.subr.bf16.mxu0 0
    %592 = vmatpush1.bf16.msra.mxu0 %v456
    %593 = vmatprep.subr.bf16.mxu0 0
    %594 = vmatpush1.bf16.msra.mxu0 %v455
    %595 = vmatprep.subr.bf16.mxu0 0
    %596 = vmatpush1.bf16.msra.mxu0 %v454
    %597 = vmatprep.subr.bf16.mxu0 0
    %598 = vmatpush1.bf16.msra.mxu0 %v453
    %599 = vmatprep.subr.bf16.mxu0 0
    %600 = vmatpush1.bf16.msra.mxu0 %v452
    %601 = vmatprep.subr.bf16.mxu0 0
    %602 = vmatpush2.bf16.msra.mxu0 %v467
    %603 = vmatprep.subr.bf16.mxu0 0
    %604 = vmatpush2.bf16.msra.mxu0 %v466
    %605 = vmatprep.subr.bf16.mxu0 0
    %606 = vmatpush2.bf16.msra.mxu0 %v465
    %607 = vmatprep.subr.bf16.mxu0 0
    %608 = vmatpush2.bf16.msra.mxu0 %v464
    %609 = vmatprep.subr.bf16.mxu0 0
    %610 = vmatpush2.bf16.msra.mxu0 %v463
    %611 = vmatprep.subr.bf16.mxu0 0
    %612 = vmatpush2.bf16.msra.mxu0 %v462
    %613 = vmatprep.subr.bf16.mxu0 0
    %614 = vmatpush2.bf16.msra.mxu0 %v461
    %615 = vmatprep.subr.bf16.mxu0 0
    %616 = vmatpush2.bf16.msra.mxu0 %v460
    %617 = vmatprep.mubr.bf16.mxu0 %v63
    %618 = vmatmul.mubr.bf16.gmra.mxu0 %v62
    %v619 = vpop.f32.mrf.mxu0
    %v620 = vadd.f32 %v200, %v619
    %v621 = vpop.f32.mrf.mxu0
    %v622 = vpop.f32.mrf.mxu0
    %v623 = vpop.f32.mrf.mxu0
    %624 = vdwg.mxu0
    %625 = vmatprep.subr.bf16.mxu0 0
    %626 = vmatpush1.bf16.msra.mxu0 %v475
    %627 = vmatprep.subr.bf16.mxu0 0
    %628 = vmatpush1.bf16.msra.mxu0 %v474
    %629 = vmatprep.subr.bf16.mxu0 0
    %630 = vmatpush1.bf16.msra.mxu0 %v473
    %631 = vmatprep.subr.bf16.mxu0 0
    %632 = vmatpush1.bf16.msra.mxu0 %v472
    %633 = vmatprep.subr.bf16.mxu0 0
    %634 = vmatpush1.bf16.msra.mxu0 %v471
    %635 = vmatprep.subr.bf16.mxu0 0
    %636 = vmatpush1.bf16.msra.mxu0 %v470
    %637 = vmatprep.subr.bf16.mxu0 0
    %638 = vmatpush1.bf16.msra.mxu0 %v469
    %639 = vmatprep.subr.bf16.mxu0 0
    %640 = vmatpush1.bf16.msra.mxu0 %v468
    %641 = vmatprep.subr.bf16.mxu0 0
    %642 = vmatpush2.bf16.msra.mxu0 %v483
    %643 = vmatprep.subr.bf16.mxu0 0
    %644 = vmatpush2.bf16.msra.mxu0 %v482
    %645 = vmatprep.subr.bf16.mxu0 0
    %646 = vmatpush2.bf16.msra.mxu0 %v481
    %647 = vmatprep.subr.bf16.mxu0 0
    %648 = vmatpush2.bf16.msra.mxu0 %v480
    %649 = vmatprep.subr.bf16.mxu0 0
    %650 = vmatpush2.bf16.msra.mxu0 %v479
    %651 = vmatprep.subr.bf16.mxu0 0
    %652 = vmatpush2.bf16.msra.mxu0 %v478
    %653 = vmatprep.subr.bf16.mxu0 0
    %654 = vmatpush2.bf16.msra.mxu0 %v477
    %655 = vmatprep.subr.bf16.mxu0 0
    %656 = vmatpush2.bf16.msra.mxu0 %v476
    %657 = vmatprep.mubr.bf16.mxu0 %v65
    %658 = vmatmul.mubr.bf16.gmra.mxu0 %v64
    %v659 = vpop.f32.mrf.mxu0
    %v660 = vadd.f32 %v620, %v659
    %v661 = vpop.f32.mrf.mxu0
    %v662 = vpop.f32.mrf.mxu0
    %v663 = vpop.f32.mrf.mxu0
    %664 = vdwg.mxu0
    %665 = vmatprep.subr.bf16.mxu0 0
    %666 = vmatpush1.bf16.msra.mxu0 %v491
    %667 = vmatprep.subr.bf16.mxu0 0
    %668 = vmatpush1.bf16.msra.mxu0 %v490
    %669 = vmatprep.subr.bf16.mxu0 0
    %670 = vmatpush1.bf16.msra.mxu0 %v489
    %671 = vmatprep.subr.bf16.mxu0 0
    %672 = vmatpush1.bf16.msra.mxu0 %v488
    %673 = vmatprep.subr.bf16.mxu0 0
    %674 = vmatpush1.bf16.msra.mxu0 %v487
    %675 = vmatprep.subr.bf16.mxu0 0
    %676 = vmatpush1.bf16.msra.mxu0 %v486
    %677 = vmatprep.subr.bf16.mxu0 0
    %678 = vmatpush1.bf16.msra.mxu0 %v485
    %679 = vmatprep.subr.bf16.mxu0 0
    %680 = vmatpush1.bf16.msra.mxu0 %v484
    %681 = vmatprep.subr.bf16.mxu0 0
    %682 = vmatpush2.bf16.msra.mxu0 %v499
    %683 = vmatprep.subr.bf16.mxu0 0
    %684 = vmatpush2.bf16.msra.mxu0 %v498
    %685 = vmatprep.subr.bf16.mxu0 0
    %686 = vmatpush2.bf16.msra.mxu0 %v497
    %687 = vmatprep.subr.bf16.mxu0 0
    %688 = vmatpush2.bf16.msra.mxu0 %v496
    %689 = vmatprep.subr.bf16.mxu0 0
    %690 = vmatpush2.bf16.msra.mxu0 %v495
    %691 = vmatprep.subr.bf16.mxu0 0
    %692 = vmatpush2.bf16.msra.mxu0 %v494
    %693 = vmatprep.subr.bf16.mxu0 0
    %694 = vmatpush2.bf16.msra.mxu0 %v493
    %695 = vmatprep.subr.bf16.mxu0 0
    %696 = vmatpush2.bf16.msra.mxu0 %v492
    %697 = vmatprep.mubr.bf16.mxu0 %v67
    %698 = vmatmul.mubr.bf16.gmra.mxu0 %v66
    %v699 = vpop.f32.mrf.mxu0
    %v700 = vadd.f32 %v660, %v699
    %v701 = vpop.f32.mrf.mxu0
    %v702 = vpop.f32.mrf.mxu0
    %v703 = vpop.f32.mrf.mxu0
    %704 = vdwg.mxu0
    %705 = vmatprep.subr.bf16.mxu0 0
    %706 = vmatpush1.bf16.msra.mxu0 %v507
    %707 = vmatprep.subr.bf16.mxu0 0
    %708 = vmatpush1.bf16.msra.mxu0 %v506
    %709 = vmatprep.subr.bf16.mxu0 0
    %710 = vmatpush1.bf16.msra.mxu0 %v505
    %711 = vmatprep.subr.bf16.mxu0 0
    %712 = vmatpush1.bf16.msra.mxu0 %v504
    %713 = vmatprep.subr.bf16.mxu0 0
    %714 = vmatpush1.bf16.msra.mxu0 %v503
    %715 = vmatprep.subr.bf16.mxu0 0
    %716 = vmatpush1.bf16.msra.mxu0 %v502
    %717 = vmatprep.subr.bf16.mxu0 0
    %718 = vmatpush1.bf16.msra.mxu0 %v501
    %719 = vmatprep.subr.bf16.mxu0 0
    %720 = vmatpush1.bf16.msra.mxu0 %v500
    %721 = vmatprep.subr.bf16.mxu0 0
    %722 = vmatpush2.bf16.msra.mxu0 0
    %723 = vmatprep.subr.bf16.mxu0 0
    %724 = vmatpush2.bf16.msra.mxu0 %v583
    %725 = vmatprep.subr.bf16.mxu0 0
    %726 = vmatpush2.bf16.msra.mxu0 %v513
    %727 = vmatprep.subr.bf16.mxu0 0
    %728 = vmatpush2.bf16.msra.mxu0 %v512
    %729 = vmatprep.subr.bf16.mxu0 0
    %730 = vmatpush2.bf16.msra.mxu0 %v511
    %731 = vmatprep.subr.bf16.mxu0 0
    %732 = vmatpush2.bf16.msra.mxu0 %v510
    %733 = vmatprep.subr.bf16.mxu0 0
    %734 = vmatpush2.bf16.msra.mxu0 %v509
    %735 = vmatprep.subr.bf16.mxu0 0
    %736 = vmatpush2.bf16.msra.mxu0 %v508
    %737 = vmatprep.mubr.bf16.mxu0 %v579
    %738 = vmatmul.mubr.bf16.gmra.mxu0 %v68
    %v739 = vpop.f32.mrf.mxu0
    %v740 = vadd.f32 %v700, %v739
    %v741 = vpop.f32.mrf.mxu0
    %v742 = vpop.f32.mrf.mxu0
    %v743 = vpop.f32.mrf.mxu0
    %744 = vdwg.mxu0
    %vm745 = vcmask 74752
    %746 = vst.msk [vmem:[#allocation2] sm:$0x3] %vm745, %v740
    // Predicated region
    $region14: #{tpu_custom_call.1} parent=1 // pred_check
      _
    $region15: #{tpu_custom_call.1} parent=1 // pred_check_branch
      %748 = sbr.rel (0) target = $region17
    $region16: #{tpu_custom_call.1} parent=1 // pred_region
      %s750 = ssub.s32 32, 32
      %751 = vsyncadd [#allocation3], %s750
      %s753 = sshll.u32 [#allocation2], 4
      %s754 = int_to_ptr.vmem [resolvable:$true] %s753
      %756 = dma.vmem_to_hbm [thread:$0]  %s754, 32, %s3, [#allocation3]
    $region17: #{tpu_custom_call.1} parent=1 // pred_fallthru
      _
    // Predicated region
    $region18: #{tpu_custom_call.1} parent=1 // pred_check
      _
    $region19: #{tpu_custom_call.1} parent=1 // pred_check_branch
      %758 = sbr.rel (0) target = $region21
    $region20: #{tpu_custom_call.1} parent=1 // pred_region
      %759 = dma.done [#allocation3], 32
    $region21: #{tpu_custom_call.1} parent=1 // pred_fallthru
      _
    %760 = vsyncpa [#allocation3], 1

</llo_original>
